<compile_context>
chip_gen: v7x
topology: tpu7x:2x2x1
jax: 0.10.0
libtpu: 0.0.40
codegen_flags: <defaults>
</compile_context>

<pallas_src>
import functools

import jax
import jax.numpy as jnp
from jax.experimental import pallas as pl
from jax.experimental.pallas import tpu as pltpu

_PAD_OUT = 128  # lane-dense padded output width (real width is 65)


def mlp_kernel(x_ref, w1_ref, b1_ref, w2_ref, b2_ref, w3_ref, b3_ref, o_ref):
    # x arrives as f32; in-kernel VPU cast to bf16 is free vs. an extra HBM
    # round-trip for a wrapper-side cast.
    x = x_ref[...].astype(jnp.bfloat16)
    # Layer 1: [TB,128]bf16 @ [128,256]bf16 -> f32 acc, bias+ReLU in f32.
    h1 = jnp.dot(x, w1_ref[...], preferred_element_type=jnp.float32)
    h1 = jnp.maximum(h1 + b1_ref[...], 0.0)
    # Layer 2: [TB,256] @ [256,128] -> f32 acc, bias+ReLU in f32.
    h2 = jnp.dot(h1.astype(jnp.bfloat16), w2_ref[...],
                 preferred_element_type=jnp.float32)
    h2 = jnp.maximum(h2 + b2_ref[...], 0.0)
    # Layer 3 (padded to 128 output lanes): [TB,128] @ [128,128] -> tanh.
    h3 = jnp.dot(h2.astype(jnp.bfloat16), w3_ref[...],
                 preferred_element_type=jnp.float32)
    # bf16 writeback halves output HBM traffic (tanh output is in [-1,1]).
    o_ref[...] = jnp.tanh(h3 + b3_ref[...]).astype(o_ref.dtype)


def prepare_params(params):
    """One-time parameter prep (hoisted out of the per-call path):
    bf16 weight casts + zero-padding of layer 3 to a lane-dense 128 output.
    Padded w3/b3 columns are zero, so padded outputs are harmless tanh(0)=0."""
    w1, b1, w2, b2, w3, b3 = params
    out_dim = w3.shape[1]
    w3p = jnp.zeros((w3.shape[0], _PAD_OUT), w3.dtype).at[:, :out_dim].set(w3)
    b3p = jnp.zeros((1, _PAD_OUT), b3.dtype).at[:, :out_dim].set(b3)
    prepared = (w1.astype(jnp.bfloat16), b1.astype(jnp.float32),
                w2.astype(jnp.bfloat16), b2.astype(jnp.float32),
                w3p.astype(jnp.bfloat16), b3p.astype(jnp.float32))
    return prepared, out_dim


def _choose_tb(bp, tb_max):
    """Pick the batch tile: largest multiple of 8 <= tb_max that
    (a) keeps grid length >= 2 when the batch allows (v7x megacore), and
    (b) divides the (sublane-rounded) batch if achievable without shrinking
        the tile much — avoids padding the input."""
    cap = min(tb_max, bp)
    if bp >= 16:
        cap = min(cap, bp // 2)          # keep at least 2 grid steps
    cap = max(8, (cap // 8) * 8)
    lo = max(8, cap - 256)
    for tb in range(cap, lo - 1, -8):    # prefer an exact divisor of bp
        if bp % tb == 0:
            return tb
    return cap                           # accept a little padding instead


@functools.partial(jax.jit, static_argnames=("out_dim", "tb_max"))
def mlp_forward(x, prepared, *, out_dim=65, tb_max=1024):
    """x: [B,128] f32. prepared: output of prepare_params(). Returns [B,out_dim]
    bf16 (bf16-quantized output; see prep notes)."""
    w1, b1, w2, b2, w3p, b3p = prepared
    B, D = x.shape

    bp = ((B + 7) // 8) * 8              # round batch up to sublane multiple
    tb = _choose_tb(bp, tb_max)
    bp = pl.cdiv(bp, tb) * tb
    xp = x if bp == B else jnp.pad(x, ((0, bp - B), (0, 0)))

    # Weights/biases: full-array blocks, constant index_map -> VMEM-resident
    # across all grid steps.
    def wspec(a):
        return pl.BlockSpec(a.shape, lambda i, _nd=a.ndim: (0,) * _nd)

    out = pl.pallas_call(
        mlp_kernel,
        out_shape=jax.ShapeDtypeStruct((bp, _PAD_OUT), jnp.bfloat16),
        grid=(bp // tb,),
        in_specs=[pl.BlockSpec((tb, D), lambda i: (i, 0)),
                  wspec(w1), wspec(b1),
                  wspec(w2), wspec(b2),
                  wspec(w3p), wspec(b3p)],
        out_specs=pl.BlockSpec((tb, _PAD_OUT), lambda i: (i, 0)),
        compiler_params=pltpu.CompilerParams(
            dimension_semantics=("parallel",)),
    )(xp, w1, b1, w2, b2, w3p, b3p)

    # Slice off padded rows/columns; under jit this fuses with the consumer.
    # If the consumer can take the padded [bp, 128] slab, drop this slice.
    return out[:B, :out_dim]


def init_params(key):
    """Deterministic init mimicking PyTorch nn.Linear default
    (U[-1/sqrt(fan_in), +1/sqrt(fan_in)]). Weights stored as [in, out]."""
    dims = [(128, 256), (256, 128), (128, 65)]
    params = []
    for fan_in, fan_out in dims:
        kw, kb, key = jax.random.split(key, 3)
        bound = 1.0 / jnp.sqrt(float(fan_in))
        w = jax.random.uniform(kw, (fan_in, fan_out), jnp.float32, -bound, bound)
        b = jax.random.uniform(kb, (1, fan_out), jnp.float32, -bound, bound)
        params.extend([w, b])
    return tuple(params)


def reference_forward(x, params):
    w1, b1, w2, b2, w3, b3 = params
    h = jnp.maximum(x @ w1 + b1, 0.0)
    h = jnp.maximum(h @ w2 + b2, 0.0)
    return jnp.tanh(h @ w3 + b3)


if __name__ == "__main__":
    key = jax.random.PRNGKey(0)
    kx, kp = jax.random.split(key)
    B = 16  # small batch; yields a 2-step grid (exercises megacore path)
    x = jax.random.normal(kx, (B, 128), jnp.float32)
    params = init_params(kp)

    prepared, out_dim = prepare_params(params)  # one-time param prep
    out = mlp_forward(x, prepared, out_dim=out_dim)
    out = jax.block_until_ready(out)

    ref = reference_forward(x, params)
    assert out.shape == (B, 65), out.shape
    # bf16 matmul operands + bf16 output -> loosened tolerance vs. f32 ref.
    assert jnp.allclose(out.astype(jnp.float32), ref, atol=2e-2, rtol=2e-2), \
        "mismatch vs reference"
    print("KERNEL_OK")
</pallas_src>

<mosaic_0001>
module attributes {stable_mosaic.version = 11 : i64} {
  func.func @mlp_kernel(%arg0: i32, %arg1: memref<8x128xf32, #tpu.memory_space<vmem>>, %arg2: memref<128x256xbf16, #tpu.memory_space<vmem>>, %arg3: memref<1x256xf32, #tpu.memory_space<vmem>>, %arg4: memref<256x128xbf16, #tpu.memory_space<vmem>>, %arg5: memref<1x128xf32, #tpu.memory_space<vmem>>, %arg6: memref<128x128xbf16, #tpu.memory_space<vmem>>, %arg7: memref<1x128xf32, #tpu.memory_space<vmem>>, %arg8: memref<8x128xbf16, #tpu.memory_space<vmem>>) attributes {dimension_semantics = [#tpu.dimension_semantics<parallel>], iteration_bounds = array<i64: 2>, scalar_prefetch = 0 : i64, scratch_operands = 0 : i64, tpu.core_type = #tpu.core_type<tc>, window_params = [{transform_indices = @transform_0, window_bounds = array<i64: 8, 128>}, {pipeline_mode = #tpu.pipeline_mode<synchronous>, transform_indices = @transform_1, window_bounds = array<i64: 128, 256>}, {pipeline_mode = #tpu.pipeline_mode<synchronous>, transform_indices = @transform_2, window_bounds = array<i64: 1, 256>}, {pipeline_mode = #tpu.pipeline_mode<synchronous>, transform_indices = @transform_3, window_bounds = array<i64: 256, 128>}, {pipeline_mode = #tpu.pipeline_mode<synchronous>, transform_indices = @transform_4, window_bounds = array<i64: 1, 128>}, {pipeline_mode = #tpu.pipeline_mode<synchronous>, transform_indices = @transform_5, window_bounds = array<i64: 128, 128>}, {pipeline_mode = #tpu.pipeline_mode<synchronous>, transform_indices = @transform_6, window_bounds = array<i64: 1, 128>}, {transform_indices = @transform_7, window_bounds = array<i64: 8, 128>}]} {
    %c0 = arith.constant 0 : index
    %c0_0 = arith.constant 0 : index
    %0 = vector.load %arg1[%c0, %c0_0] : memref<8x128xf32, #tpu.memory_space<vmem>>, vector<8x128xf32>
    %1 = arith.truncf %0 : vector<8x128xf32> to vector<8x128xbf16>
    %c0_1 = arith.constant 0 : index
    %c0_2 = arith.constant 0 : index
    %2 = vector.load %arg2[%c0_1, %c0_2] : memref<128x256xbf16, #tpu.memory_space<vmem>>, vector<128x256xbf16>
    %cst = arith.constant dense<0.000000e+00> : vector<8x256xf32>
    %3 = tpu.matmul %1, %2, %cst {dimension_numbers = #tpu.dot_dimension_numbers<[1], [0], [0], [1], [0, 0, 1, 1], [], []>} : vector<8x128xbf16>, vector<128x256xbf16>, vector<8x256xf32> -> vector<8x256xf32>
    %c0_3 = arith.constant 0 : index
    %c0_4 = arith.constant 0 : index
    %4 = vector.load %arg3[%c0_3, %c0_4] : memref<1x256xf32, #tpu.memory_space<vmem>>, vector<1x256xf32>
    %5 = vector.broadcast %4 : vector<1x256xf32> to vector<8x256xf32>
    %6 = arith.addf %3, %5 : vector<8x256xf32>
    %cst_5 = arith.constant 0.000000e+00 : f32
    %7 = vector.broadcast %cst_5 : f32 to vector<8x256xf32>
    %8 = arith.maximumf %6, %7 : vector<8x256xf32>
    %9 = arith.truncf %8 : vector<8x256xf32> to vector<8x256xbf16>
    %c0_6 = arith.constant 0 : index
    %c0_7 = arith.constant 0 : index
    %10 = vector.load %arg4[%c0_6, %c0_7] : memref<256x128xbf16, #tpu.memory_space<vmem>>, vector<256x128xbf16>
    %cst_8 = arith.constant dense<0.000000e+00> : vector<8x128xf32>
    %11 = tpu.matmul %9, %10, %cst_8 {dimension_numbers = #tpu.dot_dimension_numbers<[1], [0], [0], [1], [0, 0, 1, 1], [], []>} : vector<8x256xbf16>, vector<256x128xbf16>, vector<8x128xf32> -> vector<8x128xf32>
    %c0_9 = arith.constant 0 : index
    %c0_10 = arith.constant 0 : index
    %12 = vector.load %arg5[%c0_9, %c0_10] : memref<1x128xf32, #tpu.memory_space<vmem>>, vector<1x128xf32>
    %13 = vector.broadcast %12 : vector<1x128xf32> to vector<8x128xf32>
    %14 = arith.addf %11, %13 : vector<8x128xf32>
    %cst_11 = arith.constant 0.000000e+00 : f32
    %15 = vector.broadcast %cst_11 : f32 to vector<8x128xf32>
    %16 = arith.maximumf %14, %15 : vector<8x128xf32>
    %17 = arith.truncf %16 : vector<8x128xf32> to vector<8x128xbf16>
    %c0_12 = arith.constant 0 : index
    %c0_13 = arith.constant 0 : index
    %18 = vector.load %arg6[%c0_12, %c0_13] : memref<128x128xbf16, #tpu.memory_space<vmem>>, vector<128x128xbf16>
    %cst_14 = arith.constant dense<0.000000e+00> : vector<8x128xf32>
    %19 = tpu.matmul %17, %18, %cst_14 {dimension_numbers = #tpu.dot_dimension_numbers<[1], [0], [0], [1], [0, 0, 1, 1], [], []>} : vector<8x128xbf16>, vector<128x128xbf16>, vector<8x128xf32> -> vector<8x128xf32>
    %c0_15 = arith.constant 0 : index
    %c0_16 = arith.constant 0 : index
    %20 = vector.load %arg7[%c0_15, %c0_16] : memref<1x128xf32, #tpu.memory_space<vmem>>, vector<1x128xf32>
    %21 = vector.broadcast %20 : vector<1x128xf32> to vector<8x128xf32>
    %22 = arith.addf %19, %21 : vector<8x128xf32>
    %23 = math.tanh %22 : vector<8x128xf32>
    %24 = arith.truncf %23 : vector<8x128xf32> to vector<8x128xbf16>
    %c0_17 = arith.constant 0 : index
    %c0_18 = arith.constant 0 : index
    %25 = vector.load %arg8[%c0_17, %c0_18] : memref<8x128xbf16, #tpu.memory_space<vmem>>, vector<8x128xbf16>
    tpu.vector_store %arg8[%c0_17, %c0_18], %24 {strides = array<i32>} : memref<8x128xbf16, #tpu.memory_space<vmem>>, vector<8x128xbf16>,
    return
  }
  func.func @transform_0(%arg0: i32) -> (i32, i32) {
    %c0_i32 = arith.constant 0 : i32
    %c0_i32_0 = arith.constant 0 : i32
    return %arg0, %c0_i32 : i32, i32
  }
  func.func @transform_1(%arg0: i32) -> (i32, i32) {
    %c0_i32 = arith.constant 0 : i32
    %c0_i32_0 = arith.constant 0 : i32
    %c0_i32_1 = arith.constant 0 : i32
    return %c0_i32, %c0_i32_0 : i32, i32
  }
  func.func @transform_2(%arg0: i32) -> (i32, i32) {
    %c0_i32 = arith.constant 0 : i32
    %c0_i32_0 = arith.constant 0 : i32
    %c0_i32_1 = arith.constant 0 : i32
    return %c0_i32, %c0_i32_0 : i32, i32
  }
  func.func @transform_3(%arg0: i32) -> (i32, i32) {
    %c0_i32 = arith.constant 0 : i32
    %c0_i32_0 = arith.constant 0 : i32
    %c0_i32_1 = arith.constant 0 : i32
    return %c0_i32, %c0_i32_0 : i32, i32
  }
  func.func @transform_4(%arg0: i32) -> (i32, i32) {
    %c0_i32 = arith.constant 0 : i32
    %c0_i32_0 = arith.constant 0 : i32
    %c0_i32_1 = arith.constant 0 : i32
    return %c0_i32, %c0_i32_0 : i32, i32
  }
  func.func @transform_5(%arg0: i32) -> (i32, i32) {
    %c0_i32 = arith.constant 0 : i32
    %c0_i32_0 = arith.constant 0 : i32
    %c0_i32_1 = arith.constant 0 : i32
    return %c0_i32, %c0_i32_0 : i32, i32
  }
  func.func @transform_6(%arg0: i32) -> (i32, i32) {
    %c0_i32 = arith.constant 0 : i32
    %c0_i32_0 = arith.constant 0 : i32
    %c0_i32_1 = arith.constant 0 : i32
    return %c0_i32, %c0_i32_0 : i32, i32
  }
  func.func @transform_7(%arg0: i32) -> (i32, i32) {
    %c0_i32 = arith.constant 0 : i32
    %c0_i32_0 = arith.constant 0 : i32
    return %arg0, %c0_i32 : i32, i32
  }
}

</mosaic_0001>

<llo_original>
// kernel: mlp_forward.1
$region0: #{mlp_forward.1}
  #allocation0 [shape = 'u32[]', space=smem, size = 0x4, offset = 0x4, fixed_abs, tag = 'smem constant byte address 0x4 - core index']
  #allocation1 [shape = 'u32[144,128]{1,0:T(1,128)}', space=vmem, size = 0x12000, scoped, tag = 'internal scratch']
  %s0 = inlined_call_operand.hbm [shape: f32[16,128], index: 0, kind: input, shape index: {}]
  %s1 = inlined_call_operand.hbm [shape: bf16[128,256], index: 1, kind: input, shape index: {}]
  %s2 = inlined_call_operand.vmem [shape: f32[1,256], index: 2, kind: input, shape index: {}]
  %s3 = inlined_call_operand.hbm [shape: bf16[256,128], index: 3, kind: input, shape index: {}]
  %s4 = inlined_call_operand.vmem [shape: f32[1,128], index: 4, kind: input, shape index: {}]
  %s5 = inlined_call_operand.hbm [shape: bf16[128,128], index: 5, kind: input, shape index: {}]
  %s6 = inlined_call_operand.vmem [shape: f32[1,128], index: 6, kind: input, shape index: {}]
  %s7 = inlined_call_operand.hbm [shape: bf16[16,128], index: 7, kind: output, shape index: {}]
  %s8 = sld [smem:[#allocation0]]
  $region77: #{mlp_forward.1} parent=0
    _
  %s10 = ssub.s32 1, %s8
  %s11 = scalar_select 0, %s10, %s8
  $region1: #{mlp_forward.1} parent=0
    #allocation2 [shape = 'u8[8192]{0}', space=vmem, size = 0x2000, scoped, tag = 'input window, operand 0']
    #allocation3 [shape = 's32[2]{0}', space=sflag, size = 0x8, scoped, tag = 'scoped memory for mlp_forward.1']
    #allocation4 [shape = 's32[2]{0}', space=sflag, size = 0x8, scoped, tag = 'scoped memory for mlp_forward.1']
    #allocation5 [shape = 'u8[65536]{0}', space=vmem, size = 0x10000, scoped, tag = 'input window, operand 1, single buffered']
    #allocation6 [shape = 's32[1]{0}', space=sflag, size = 0x4, scoped, tag = 'scoped memory for mlp_forward.1']
    #allocation7 [shape = 'u8[65536]{0}', space=vmem, size = 0x10000, scoped, tag = 'input window, operand 3, single buffered']
    #allocation8 [shape = 'u8[32768]{0}', space=vmem, size = 0x8000, scoped, tag = 'input window, operand 5, single buffered']
    #allocation9 [shape = 's32[1]{0}', space=sflag, size = 0x4, scoped, tag = 'scoped memory for mlp_forward.1']
    #allocation10 [shape = 'u8[4096]{0}', space=vmem, size = 0x1000, scoped, tag = 'output window, operand 0']
    %12 = vsyncpa [#allocation3], 0
    %s13 = scalar_lea.sflag [#allocation3], 1
    %14 = vsyncpa %s13, 0
    %15 = vsyncpa [#allocation6], 0
    %16 = vsyncpa [#allocation9], 0
    %17 = vsyncpa [#allocation4], 0
    %s18 = scalar_lea.sflag [#allocation4], 1
    %19 = vsyncpa %s18, 0
    loop: start=0, step=1, limit=4
    $region2: #{mlp_forward.1} parent=1 // loop_pre_header
      _
    $region3: #{mlp_forward.1} parent=1 // loop_header
      %s21 = sphi 0, %s25
      %p22 = scmp.ge.s32.totalorder %s21, 4
      %s31 = sphi 0, %s33
      %s34 = sphi 0, %s31
      %s35 = sphi 0, %s34
      %s51 = sphi 0, %s35
      %s55 = sphi 0, %s55
      %s57 = sphi 0, %s55
      %s58 = sphi 0, %s57
      %s72 = sphi 0, %s58
      %s76 = sphi 0, %s76
      %s78 = sphi 0, %s76
      %s79 = sphi 0, %s78
      %s93 = sphi 0, %s79
      %s97 = sphi 0, %s97
      %s99 = sphi 0, %s97
      %s100 = sphi 0, %s99
      %s114 = sphi 0, %s100
      %s118 = sphi 0, %s118
      %s120 = sphi 0, %s118
      %s121 = sphi 0, %s120
      %s135 = sphi 0, %s121
      %s139 = sphi 0, %s139
      %s141 = sphi 0, %s139
      %s142 = sphi 0, %s141
      %s156 = sphi 0, %s142
      %s160 = sphi 0, %s160
      %s162 = sphi 0, %s160
      %s163 = sphi 0, %s162
      %s177 = sphi 0, %s163
      %s183 = sphi 0, %s185
      %s186 = sphi 0, %s183
      %s187 = sphi 0, %s186
      %s203 = sphi 0, %s187
    $region4: #{mlp_forward.1} parent=1 // loop_header_branch
      %24 = sbr.rel (%p22) target = $region8
    $region5: #{mlp_forward.1} parent=1 // loop_body
      %s26 = ssub.s32 %s21, 1
      %s27 = ssub.s32 %s21, 2
      %s28 = sadd.s32 %s21, 1
      %s29 = ssub.s32 %s21, %s28
      %p30 = scmp.eq.s32.totalorder %s29, 0
      %s32 = sadd.s32 %s31, 1
      %s33 = scalar_select %p30, %s31, %s32
      %p36 = pneg %p30
      %p37 = scmp.eq.s32.totalorder %s21, 1
      %p38 = por %p36, %p37
      %p39 = scmp.ne.s32.totalorder %s31, %s34
      %p40 = scmp.eq.s32.totalorder %s21, 0
      %p41 = por %p39, %p40
      %p42 = scmp.ne.s32.totalorder %s31, %s34
      %p43 = scmp.eq.s32.totalorder %s26, 1
      %p44 = por %p42, %p43
      %p45 = scmp.ne.s32.totalorder %s34, %s35
      %p46 = scmp.eq.s32.totalorder %s26, 0
      %p47 = por %p45, %p46
      %p48 = scmp.ne.s32.totalorder %s34, %s35
      %p49 = scmp.eq.s32.totalorder %s27, 1
      %p50 = por %p48, %p49
      %p52 = scmp.ne.s32.totalorder %s35, %s51
      %p53 = scmp.eq.s32.totalorder %s27, 0
      %p54 = por %p52, %p53
      %s56 = sadd.s32 %s55, 1
      %p59 = scmp.eq.s32.totalorder %s21, 1
      %p60 = scmp.ne.s32.totalorder %s55, %s57
      %p61 = scmp.eq.s32.totalorder %s21, 0
      %p62 = por %p60, %p61
      %p63 = scmp.ne.s32.totalorder %s55, %s57
      %p64 = scmp.eq.s32.totalorder %s26, 1
      %p65 = por %p63, %p64
      %p66 = scmp.ne.s32.totalorder %s57, %s58
      %p67 = scmp.eq.s32.totalorder %s26, 0
      %p68 = por %p66, %p67
      %p69 = scmp.ne.s32.totalorder %s57, %s58
      %p70 = scmp.eq.s32.totalorder %s27, 1
      %p71 = por %p69, %p70
      %p73 = scmp.ne.s32.totalorder %s58, %s72
      %p74 = scmp.eq.s32.totalorder %s27, 0
      %p75 = por %p73, %p74
      %s77 = sadd.s32 %s76, 1
      %p80 = scmp.eq.s32.totalorder %s21, 1
      %p81 = scmp.ne.s32.totalorder %s76, %s78
      %p82 = scmp.eq.s32.totalorder %s21, 0
      %p83 = por %p81, %p82
      %p84 = scmp.ne.s32.totalorder %s76, %s78
      %p85 = scmp.eq.s32.totalorder %s26, 1
      %p86 = por %p84, %p85
      %p87 = scmp.ne.s32.totalorder %s78, %s79
      %p88 = scmp.eq.s32.totalorder %s26, 0
      %p89 = por %p87, %p88
      %p90 = scmp.ne.s32.totalorder %s78, %s79
      %p91 = scmp.eq.s32.totalorder %s27, 1
      %p92 = por %p90, %p91
      %p94 = scmp.ne.s32.totalorder %s79, %s93
      %p95 = scmp.eq.s32.totalorder %s27, 0
      %p96 = por %p94, %p95
      %s98 = sadd.s32 %s97, 1
      %p101 = scmp.eq.s32.totalorder %s21, 1
      %p102 = scmp.ne.s32.totalorder %s97, %s99
      %p103 = scmp.eq.s32.totalorder %s21, 0
      %p104 = por %p102, %p103
      %p105 = scmp.ne.s32.totalorder %s97, %s99
      %p106 = scmp.eq.s32.totalorder %s26, 1
      %p107 = por %p105, %p106
      %p108 = scmp.ne.s32.totalorder %s99, %s100
      %p109 = scmp.eq.s32.totalorder %s26, 0
      %p110 = por %p108, %p109
      %p111 = scmp.ne.s32.totalorder %s99, %s100
      %p112 = scmp.eq.s32.totalorder %s27, 1
      %p113 = por %p111, %p112
      %p115 = scmp.ne.s32.totalorder %s100, %s114
      %p116 = scmp.eq.s32.totalorder %s27, 0
      %p117 = por %p115, %p116
      %s119 = sadd.s32 %s118, 1
      %p122 = scmp.eq.s32.totalorder %s21, 1
      %p123 = scmp.ne.s32.totalorder %s118, %s120
      %p124 = scmp.eq.s32.totalorder %s21, 0
      %p125 = por %p123, %p124
      %p126 = scmp.ne.s32.totalorder %s118, %s120
      %p127 = scmp.eq.s32.totalorder %s26, 1
      %p128 = por %p126, %p127
      %p129 = scmp.ne.s32.totalorder %s120, %s121
      %p130 = scmp.eq.s32.totalorder %s26, 0
      %p131 = por %p129, %p130
      %p132 = scmp.ne.s32.totalorder %s120, %s121
      %p133 = scmp.eq.s32.totalorder %s27, 1
      %p134 = por %p132, %p133
      %p136 = scmp.ne.s32.totalorder %s121, %s135
      %p137 = scmp.eq.s32.totalorder %s27, 0
      %p138 = por %p136, %p137
      %s140 = sadd.s32 %s139, 1
      %p143 = scmp.eq.s32.totalorder %s21, 1
      %p144 = scmp.ne.s32.totalorder %s139, %s141
      %p145 = scmp.eq.s32.totalorder %s21, 0
      %p146 = por %p144, %p145
      %p147 = scmp.ne.s32.totalorder %s139, %s141
      %p148 = scmp.eq.s32.totalorder %s26, 1
      %p149 = por %p147, %p148
      %p150 = scmp.ne.s32.totalorder %s141, %s142
      %p151 = scmp.eq.s32.totalorder %s26, 0
      %p152 = por %p150, %p151
      %p153 = scmp.ne.s32.totalorder %s141, %s142
      %p154 = scmp.eq.s32.totalorder %s27, 1
      %p155 = por %p153, %p154
      %p157 = scmp.ne.s32.totalorder %s142, %s156
      %p158 = scmp.eq.s32.totalorder %s27, 0
      %p159 = por %p157, %p158
      %s161 = sadd.s32 %s160, 1
      %p164 = scmp.eq.s32.totalorder %s21, 1
      %p165 = scmp.ne.s32.totalorder %s160, %s162
      %p166 = scmp.eq.s32.totalorder %s21, 0
      %p167 = por %p165, %p166
      %p168 = scmp.ne.s32.totalorder %s160, %s162
      %p169 = scmp.eq.s32.totalorder %s26, 1
      %p170 = por %p168, %p169
      %p171 = scmp.ne.s32.totalorder %s162, %s163
      %p172 = scmp.eq.s32.totalorder %s26, 0
      %p173 = por %p171, %p172
      %p174 = scmp.ne.s32.totalorder %s162, %s163
      %p175 = scmp.eq.s32.totalorder %s27, 1
      %p176 = por %p174, %p175
      %p178 = scmp.ne.s32.totalorder %s163, %s177
      %p179 = scmp.eq.s32.totalorder %s27, 0
      %p180 = por %p178, %p179
      %s181 = ssub.s32 %s21, %s28
      %p182 = scmp.eq.s32.totalorder %s181, 0
      %s184 = sadd.s32 %s183, 1
      %s185 = scalar_select %p182, %s183, %s184
      %p188 = pneg %p182
      %p189 = scmp.eq.s32.totalorder %s21, 1
      %p190 = por %p188, %p189
      %p191 = scmp.ne.s32.totalorder %s183, %s186
      %p192 = scmp.eq.s32.totalorder %s21, 0
      %p193 = por %p191, %p192
      %p194 = scmp.ne.s32.totalorder %s183, %s186
      %p195 = scmp.eq.s32.totalorder %s26, 1
      %p196 = por %p194, %p195
      %p197 = scmp.ne.s32.totalorder %s186, %s187
      %p198 = scmp.eq.s32.totalorder %s26, 0
      %p199 = por %p197, %p198
      %p200 = scmp.ne.s32.totalorder %s186, %s187
      %p201 = scmp.eq.s32.totalorder %s27, 1
      %p202 = por %p200, %p201
      %p204 = scmp.ne.s32.totalorder %s187, %s203
      %p205 = scmp.eq.s32.totalorder %s27, 0
      %p206 = por %p204, %p205
      %p207 = scmp.le.s32.totalorder 1, %s21
      %p208 = scmp.lt.s32.totalorder %s21, 3
      %p209 = pnand %p207, %p208
      %p210 = pneg %p209
      // Predicated region
      $region9: #{mlp_forward.1} parent=5 // pred_check
        _
      $region10: #{mlp_forward.1} parent=5 // pred_check_branch
        %212 = sbr.rel (%p209) target = $region12
      $region11: #{mlp_forward.1} parent=5 // pred_region
        %s213 = ssub.s32 %s21, 1
        // Predicated region
        $region13: #{mlp_forward.1} parent=11 // pred_check
          %p214 = pneg %p68
        $region14: #{mlp_forward.1} parent=11 // pred_check_branch
          %216 = sbr.rel (%p214) target = $region16
        $region15: #{mlp_forward.1} parent=11 // pred_region
          %s218 = ssub.s32 2048, 2048
          %219 = vsyncadd [#allocation6], %s218
          %s220 = sshll.u32 [#allocation5], 4
          %s221 = int_to_ptr.vmem [resolvable:$true] %s220
          %226 = dma.hbm_to_vmem [thread:$0]  %s1, 2048, %s221, [#allocation6], 128, 128, 8
        $region16: #{mlp_forward.1} parent=11 // pred_fallthru
          _
        // Predicated region
        $region17: #{mlp_forward.1} parent=11 // pred_check
          %p227 = pneg %p89
        $region18: #{mlp_forward.1} parent=11 // pred_check_branch
          %229 = sbr.rel (%p227) target = $region20
        $region19: #{mlp_forward.1} parent=11 // pred_region
          _
        $region20: #{mlp_forward.1} parent=11 // pred_fallthru
          _
        // Predicated region
        $region21: #{mlp_forward.1} parent=11 // pred_check
          %p230 = pneg %p110
        $region22: #{mlp_forward.1} parent=11 // pred_check_branch
          %232 = sbr.rel (%p230) target = $region24
        $region23: #{mlp_forward.1} parent=11 // pred_region
          %s234 = ssub.s32 2048, 2048
          %235 = vsyncadd [#allocation6], %s234
          %s236 = sshll.u32 [#allocation7], 4
          %s237 = int_to_ptr.vmem [resolvable:$true] %s236
          %242 = dma.hbm_to_vmem [thread:$0]  %s3, 2048, %s237, [#allocation6], 64, 64, 4
        $region24: #{mlp_forward.1} parent=11 // pred_fallthru
          _
        // Predicated region
        $region25: #{mlp_forward.1} parent=11 // pred_check
          %p243 = pneg %p131
        $region26: #{mlp_forward.1} parent=11 // pred_check_branch
          %245 = sbr.rel (%p243) target = $region28
        $region27: #{mlp_forward.1} parent=11 // pred_region
          _
        $region28: #{mlp_forward.1} parent=11 // pred_fallthru
          _
        // Predicated region
        $region29: #{mlp_forward.1} parent=11 // pred_check
          %p246 = pneg %p152
        $region30: #{mlp_forward.1} parent=11 // pred_check_branch
          %248 = sbr.rel (%p246) target = $region32
        $region31: #{mlp_forward.1} parent=11 // pred_region
          %s250 = ssub.s32 1024, 1024
          %251 = vsyncadd [#allocation9], %s250
          %s252 = sshll.u32 [#allocation8], 4
          %s253 = int_to_ptr.vmem [resolvable:$true] %s252
          %258 = dma.hbm_to_vmem [thread:$0]  %s5, 1024, %s253, [#allocation9], 64, 64, 4
        $region32: #{mlp_forward.1} parent=11 // pred_fallthru
          _
        // Predicated region
        $region33: #{mlp_forward.1} parent=11 // pred_check
          %p259 = pneg %p173
        $region34: #{mlp_forward.1} parent=11 // pred_check_branch
          %261 = sbr.rel (%p259) target = $region36
        $region35: #{mlp_forward.1} parent=11 // pred_region
          _
        $region36: #{mlp_forward.1} parent=11 // pred_fallthru
          _
      $region12: #{mlp_forward.1} parent=5 // pred_fallthru
        _
      %p262 = scmp.lt.s32.totalorder %s21, 2
      // Predicated region
      $region37: #{mlp_forward.1} parent=5 // pred_check
        %p263 = pneg %p262
      $region38: #{mlp_forward.1} parent=5 // pred_check_branch
        %265 = sbr.rel (%p263) target = $region40
      $region39: #{mlp_forward.1} parent=5 // pred_region
        // Predicated region
        $region41: #{mlp_forward.1} parent=39 // pred_check
          %p266 = pneg %p41
        $region42: #{mlp_forward.1} parent=39 // pred_check_branch
          %268 = sbr.rel (%p266) target = $region44
        $region43: #{mlp_forward.1} parent=39 // pred_region
          %s269 = sand.u32 %s31, 1
          %s270 = scalar_lea.sflag [#allocation3], %s269
          %s271 = sand.u32 %s31, 1
          %s272 = smul.addr %s271, 8
          %s273 = scalar_lea.vmem [#allocation2], %s272
          %s275 = ssub.s32 128, 128
          %276 = vsyncadd %s270, %s275
          %s277 = smul.addr %s21, 128
          %s278 = scalar_lea.hbm %s0, %s277
          %s280 = sshll.u32 %s273, 4
          %s281 = int_to_ptr.vmem [resolvable:$true] %s280
          %283 = dma.hbm_to_vmem [thread:$0]  %s278, 128, %s281, %s270
        $region44: #{mlp_forward.1} parent=39 // pred_fallthru
          _
      $region40: #{mlp_forward.1} parent=5 // pred_fallthru
        _
      %p284 = scmp.le.s32.totalorder 1, %s21
      %p285 = scmp.lt.s32.totalorder %s21, 3
      %p286 = pnand %p284, %p285
      %p287 = pneg %p286
      // Predicated region
      $region45: #{mlp_forward.1} parent=5 // pred_check
        _
      $region46: #{mlp_forward.1} parent=5 // pred_check_branch
        %289 = sbr.rel (%p286) target = $region48
      $region47: #{mlp_forward.1} parent=5 // pred_region
        %s290 = ssub.s32 %s21, 1
        %s291 = sand.u32 %s34, 1
        %s292 = scalar_lea.sflag [#allocation3], %s291
        %s293 = sand.u32 %s34, 1
        %s294 = smul.addr %s293, 8
        %s295 = scalar_lea.vmem [#allocation2], %s294
        // Predicated region
        $region49: #{mlp_forward.1} parent=47 // pred_check
          %p296 = pneg %p47
        $region50: #{mlp_forward.1} parent=47 // pred_check_branch
          %298 = sbr.rel (%p296) target = $region52
        $region51: #{mlp_forward.1} parent=47 // pred_region
          %299 = dma.done %s292, 128
        $region52: #{mlp_forward.1} parent=47 // pred_fallthru
          _
        // Predicated region
        $region53: #{mlp_forward.1} parent=47 // pred_check
          %p300 = pneg %p68
        $region54: #{mlp_forward.1} parent=47 // pred_check_branch
          %302 = sbr.rel (%p300) target = $region56
        $region55: #{mlp_forward.1} parent=47 // pred_region
          %303 = dma.done [#allocation6], 2048
        $region56: #{mlp_forward.1} parent=47 // pred_fallthru
          _
        // Predicated region
        $region57: #{mlp_forward.1} parent=47 // pred_check
          %p304 = pneg %p110
        $region58: #{mlp_forward.1} parent=47 // pred_check_branch
          %306 = sbr.rel (%p304) target = $region60
        $region59: #{mlp_forward.1} parent=47 // pred_region
          %307 = dma.done [#allocation6], 2048
        $region60: #{mlp_forward.1} parent=47 // pred_fallthru
          _
        // Predicated region
        $region61: #{mlp_forward.1} parent=47 // pred_check
          %p308 = pneg %p152
        $region62: #{mlp_forward.1} parent=47 // pred_check_branch
          %310 = sbr.rel (%p308) target = $region64
        $region63: #{mlp_forward.1} parent=47 // pred_region
          %311 = dma.done [#allocation9], 1024
        $region64: #{mlp_forward.1} parent=47 // pred_fallthru
          _
        %s312 = sand.u32 %s34, 1
        %s313 = scalar_lea.sflag [#allocation3], %s312
        %s314 = sand.u32 %s34, 1
        %s315 = smul.addr %s314, 8
        %s316 = scalar_lea.vmem [#allocation2], %s315
        %p317 = pneg %p47
        %p318 = pneg %p44
        %p319 = pneg %p68
        %p320 = pneg %p65
        %p321 = pneg %p89
        %p322 = pneg %p86
        %p323 = pneg %p110
        %p324 = pneg %p107
        %p325 = pneg %p131
        %p326 = pneg %p128
        %p327 = pneg %p152
        %p328 = pneg %p149
        %p329 = pneg %p173
        %p330 = pneg %p170
        %p331 = pneg %p199
        %p332 = pneg %p196
        %s333 = sand.u32 %s186, 1
        %s334 = scalar_lea.sflag [#allocation4], %s333
        %s335 = sand.u32 %s186, 1
        %s336 = smul.addr %s335, 4
        %s337 = scalar_lea.vmem [#allocation10], %s336
        %v339 = vld [vmem:[%s295] sm:$0xff]
        %v340 = vpack.c.bf16 %v339, %v339
        %v341 = vld [vmem:[#allocation5] sm:$0xff]
        %v342 = vld [vmem:[#allocation5 + $0x8] sm:$0xff]
        %v343 = vld [vmem:[#allocation5 + $0x10] sm:$0xff]
        %v344 = vld [vmem:[#allocation5 + $0x18] sm:$0xff]
        %v345 = vld [vmem:[#allocation5 + $0x20] sm:$0xff]
        %v346 = vld [vmem:[#allocation5 + $0x28] sm:$0xff]
        %v347 = vld [vmem:[#allocation5 + $0x30] sm:$0xff]
        %v348 = vld [vmem:[#allocation5 + $0x38] sm:$0xff]
        %v349 = vld [vmem:[#allocation5 + $0x40] sm:$0xff]
        %v350 = vld [vmem:[#allocation5 + $0x48] sm:$0xff]
        %v351 = vld [vmem:[#allocation5 + $0x50] sm:$0xff]
        %v352 = vld [vmem:[#allocation5 + $0x58] sm:$0xff]
        %v353 = vld [vmem:[#allocation5 + $0x60] sm:$0xff]
        %v354 = vld [vmem:[#allocation5 + $0x68] sm:$0xff]
        %v355 = vld [vmem:[#allocation5 + $0x70] sm:$0xff]
        %v356 = vld [vmem:[#allocation5 + $0x78] sm:$0xff]
        %v357 = vld [vmem:[%s2] sm:$0x3]
        %v359 = vlaneseq
        %v360 = vshrl.u32 %v359, 7
        %v361 = vsub.s32 0, %v360
        %v362 = vrot.slane %v357, %v361
        %v363 = vlaneseq
        %v364 = vshrl.u32 %v363, 7
        %v365 = vsub.s32 1, %v364
        %v366 = vrot.slane %v357, %v365
        %v385 = vunpack.c.l.b16 %v341
        %v386 = vunpack.c.h.b16 %v341
        %v387 = vunpack.c.l.b16 %v342
        %v388 = vunpack.c.h.b16 %v342
        %v389 = vunpack.c.l.b16 %v343
        %v390 = vunpack.c.h.b16 %v343
        %v391 = vunpack.c.l.b16 %v344
        %v392 = vunpack.c.h.b16 %v344
        %v393 = vunpack.c.l.b16 %v345
        %v394 = vunpack.c.h.b16 %v345
        %v395 = vunpack.c.l.b16 %v346
        %v396 = vunpack.c.h.b16 %v346
        %v397 = vunpack.c.l.b16 %v347
        %v398 = vunpack.c.h.b16 %v347
        %v399 = vunpack.c.l.b16 %v348
        %v400 = vunpack.c.h.b16 %v348
        %v401 = vunpack.c.l.b16 %v349
        %v402 = vunpack.c.h.b16 %v349
        %v403 = vunpack.c.l.b16 %v350
        %v404 = vunpack.c.h.b16 %v350
        %v405 = vunpack.c.l.b16 %v351
        %v406 = vunpack.c.h.b16 %v351
        %v407 = vunpack.c.l.b16 %v352
        %v408 = vunpack.c.h.b16 %v352
        %v409 = vunpack.c.l.b16 %v353
        %v410 = vunpack.c.h.b16 %v353
        %v411 = vunpack.c.l.b16 %v354
        %v412 = vunpack.c.h.b16 %v354
        %v413 = vunpack.c.l.b16 %v355
        %v414 = vunpack.c.h.b16 %v355
        %v415 = vunpack.c.l.b16 %v356
        %v416 = vunpack.c.h.b16 %v356
        %v417 = vpack.c.b16 %v387, %v385
        %v418 = vpack.c.b16 %v388, %v386
        %v419 = vpack.c.b16 %v391, %v389
        %v420 = vpack.c.b16 %v392, %v390
        %v421 = vpack.c.b16 %v395, %v393
        %v422 = vpack.c.b16 %v396, %v394
        %v423 = vpack.c.b16 %v399, %v397
        %v424 = vpack.c.b16 %v400, %v398
        %v425 = vpack.c.b16 %v403, %v401
        %v426 = vpack.c.b16 %v404, %v402
        %v427 = vpack.c.b16 %v407, %v405
        %v428 = vpack.c.b16 %v408, %v406
        %v429 = vpack.c.b16 %v411, %v409
        %v430 = vpack.c.b16 %v412, %v410
        %v431 = vpack.c.b16 %v415, %v413
        %v432 = vpack.c.b16 %v416, %v414
        %449 = vmatprep.subr.bf16.mxu0 %v418
        %450 = vmatpush1.bf16.msra.mxu0 %v417
        %451 = vmatprep.subr.bf16.mxu0 %v420
        %452 = vmatpush1.bf16.msra.mxu0 %v419
        %453 = vmatprep.subr.bf16.mxu0 %v422
        %454 = vmatpush1.bf16.msra.mxu0 %v421
        %455 = vmatprep.subr.bf16.mxu0 %v424
        %456 = vmatpush1.bf16.msra.mxu0 %v423
        %457 = vmatprep.subr.bf16.mxu0 %v426
        %458 = vmatpush1.bf16.msra.mxu0 %v425
        %459 = vmatprep.subr.bf16.mxu0 %v428
        %460 = vmatpush1.bf16.msra.mxu0 %v427
        %461 = vmatprep.subr.bf16.mxu0 %v430
        %462 = vmatpush1.bf16.msra.mxu0 %v429
        %463 = vmatprep.subr.bf16.mxu0 %v432
        %464 = vmatpush1.bf16.msra.mxu0 %v431
        %465 = vmatprep.subr.bf16.mxu0 0
        %466 = vmatpush1.bf16.msra.mxu0 0
        %467 = vmatprep.subr.bf16.mxu0 0
        %468 = vmatpush1.bf16.msra.mxu0 0
        %469 = vmatprep.subr.bf16.mxu0 0
        %470 = vmatpush1.bf16.msra.mxu0 0
        %471 = vmatprep.subr.bf16.mxu0 0
        %472 = vmatpush1.bf16.msra.mxu0 0
        %473 = vmatprep.subr.bf16.mxu0 0
        %474 = vmatpush1.bf16.msra.mxu0 0
        %475 = vmatprep.subr.bf16.mxu0 0
        %476 = vmatpush1.bf16.msra.mxu0 0
        %477 = vmatprep.subr.bf16.mxu0 0
        %478 = vmatpush1.bf16.msra.mxu0 0
        %479 = vmatprep.subr.bf16.mxu0 0
        %480 = vmatpush1.bf16.msra.mxu0 0
        %481 = vmatprep.mubr.bf16.mxu0 0
        %482 = vmatmul.mubr.bf16.gmra.mrb[0].mxu0 %v340
        %v483 = vpop.f32.mrb[0].mxu0
        %v484 = vadd.f32 %v362, %v483
        %v485 = vpop.f32.mrb[0].mxu0
        %v486 = vadd.f32 %v366, %v485
        %v487 = vpop.f32.mrb[0].mxu0
        %v488 = vpop.f32.mrb[0].mxu0
        %489 = vdwg.mxu0
        %v490 = vmax.f32 %v484, 0.0
        %v491 = vmax.f32 %v486, 0.0
        %v492 = vpack.c.bf16 %v490, %v490
        %v493 = vpack.c.bf16 %v491, %v491
        %v494 = vld [vmem:[#allocation7] sm:$0xf]
        %v495 = vld [vmem:[#allocation7 + $0x4] sm:$0xf]
        %v496 = vld [vmem:[#allocation7 + $0x8] sm:$0xf]
        %v497 = vld [vmem:[#allocation7 + $0xc] sm:$0xf]
        %v498 = vld [vmem:[#allocation7 + $0x10] sm:$0xf]
        %v499 = vld [vmem:[#allocation7 + $0x14] sm:$0xf]
        %v500 = vld [vmem:[#allocation7 + $0x18] sm:$0xf]
        %v501 = vld [vmem:[#allocation7 + $0x1c] sm:$0xf]
        %v502 = vld [vmem:[#allocation7 + $0x20] sm:$0xf]
        %v503 = vld [vmem:[#allocation7 + $0x24] sm:$0xf]
        %v504 = vld [vmem:[#allocation7 + $0x28] sm:$0xf]
        %v505 = vld [vmem:[#allocation7 + $0x2c] sm:$0xf]
        %v506 = vld [vmem:[#allocation7 + $0x30] sm:$0xf]
        %v507 = vld [vmem:[#allocation7 + $0x34] sm:$0xf]
        %v508 = vld [vmem:[#allocation7 + $0x38] sm:$0xf]
        %v509 = vld [vmem:[#allocation7 + $0x3c] sm:$0xf]
        %v510 = vld [vmem:[#allocation7 + $0x40] sm:$0xf]
        %v511 = vld [vmem:[#allocation7 + $0x44] sm:$0xf]
        %v512 = vld [vmem:[#allocation7 + $0x48] sm:$0xf]
        %v513 = vld [vmem:[#allocation7 + $0x4c] sm:$0xf]
        %v514 = vld [vmem:[#allocation7 + $0x50] sm:$0xf]
        %v515 = vld [vmem:[#allocation7 + $0x54] sm:$0xf]
        %v516 = vld [vmem:[#allocation7 + $0x58] sm:$0xf]
        %v517 = vld [vmem:[#allocation7 + $0x5c] sm:$0xf]
        %v518 = vld [vmem:[#allocation7 + $0x60] sm:$0xf]
        %v519 = vld [vmem:[#allocation7 + $0x64] sm:$0xf]
        %v520 = vld [vmem:[#allocation7 + $0x68] sm:$0xf]
        %v521 = vld [vmem:[#allocation7 + $0x6c] sm:$0xf]
        %v522 = vld [vmem:[#allocation7 + $0x70] sm:$0xf]
        %v523 = vld [vmem:[#allocation7 + $0x74] sm:$0xf]
        %v524 = vld [vmem:[#allocation7 + $0x78] sm:$0xf]
        %v525 = vld [vmem:[#allocation7 + $0x7c] sm:$0xf]
        %v526 = vld [vmem:[%s4] sm:$0x1]
        %v528 = vlaneseq
        %v529 = vshrl.u32 %v528, 7
        %v530 = vsub.s32 0, %v529
        %v531 = vrot.slane %v526, %v530
        %v565 = vunpack.c.l.b16 %v494
        %v566 = vunpack.c.l.b16 %v495
        %v567 = vunpack.c.l.b16 %v496
        %v568 = vunpack.c.l.b16 %v497
        %v569 = vunpack.c.l.b16 %v498
        %v570 = vunpack.c.l.b16 %v499
        %v571 = vunpack.c.l.b16 %v500
        %v572 = vunpack.c.l.b16 %v501
        %v573 = vunpack.c.l.b16 %v502
        %v574 = vunpack.c.l.b16 %v503
        %v575 = vunpack.c.l.b16 %v504
        %v576 = vunpack.c.l.b16 %v505
        %v577 = vunpack.c.l.b16 %v506
        %v578 = vunpack.c.l.b16 %v507
        %v579 = vunpack.c.l.b16 %v508
        %v580 = vunpack.c.l.b16 %v509
        %v581 = vunpack.c.l.b16 %v510
        %v582 = vunpack.c.l.b16 %v511
        %v583 = vunpack.c.l.b16 %v512
        %v584 = vunpack.c.l.b16 %v513
        %v585 = vunpack.c.l.b16 %v514
        %v586 = vunpack.c.l.b16 %v515
        %v587 = vunpack.c.l.b16 %v516
        %v588 = vunpack.c.l.b16 %v517
        %v589 = vunpack.c.l.b16 %v518
        %v590 = vunpack.c.l.b16 %v519
        %v591 = vunpack.c.l.b16 %v520
        %v592 = vunpack.c.l.b16 %v521
        %v593 = vunpack.c.l.b16 %v522
        %v594 = vunpack.c.l.b16 %v523
        %v595 = vunpack.c.l.b16 %v524
        %v596 = vunpack.c.l.b16 %v525
        %v597 = vpack.c.b16 %v566, %v565
        %v598 = vpack.c.b16 %v568, %v567
        %v599 = vpack.c.b16 %v570, %v569
        %v600 = vpack.c.b16 %v572, %v571
        %v601 = vpack.c.b16 %v574, %v573
        %v602 = vpack.c.b16 %v576, %v575
        %v603 = vpack.c.b16 %v578, %v577
        %v604 = vpack.c.b16 %v580, %v579
        %v605 = vpack.c.b16 %v582, %v581
        %v606 = vpack.c.b16 %v584, %v583
        %v607 = vpack.c.b16 %v586, %v585
        %v608 = vpack.c.b16 %v588, %v587
        %v609 = vpack.c.b16 %v590, %v589
        %v610 = vpack.c.b16 %v592, %v591
        %v611 = vpack.c.b16 %v594, %v593
        %v612 = vpack.c.b16 %v596, %v595
        %629 = vmatprep.subr.bf16.mxu0 0
        %630 = vmatpush1.bf16.msra.mxu0 %v597
        %631 = vmatprep.subr.bf16.mxu0 0
        %632 = vmatpush1.bf16.msra.mxu0 %v598
        %633 = vmatprep.subr.bf16.mxu0 0
        %634 = vmatpush1.bf16.msra.mxu0 %v599
        %635 = vmatprep.subr.bf16.mxu0 0
        %636 = vmatpush1.bf16.msra.mxu0 %v600
        %637 = vmatprep.subr.bf16.mxu0 0
        %638 = vmatpush1.bf16.msra.mxu0 %v601
        %639 = vmatprep.subr.bf16.mxu0 0
        %640 = vmatpush1.bf16.msra.mxu0 %v602
        %641 = vmatprep.subr.bf16.mxu0 0
        %642 = vmatpush1.bf16.msra.mxu0 %v603
        %643 = vmatprep.subr.bf16.mxu0 0
        %644 = vmatpush1.bf16.msra.mxu0 %v604
        %645 = vmatprep.subr.bf16.mxu0 0
        %646 = vmatpush1.bf16.msra.mxu0 %v605
        %647 = vmatprep.subr.bf16.mxu0 0
        %648 = vmatpush1.bf16.msra.mxu0 %v606
        %649 = vmatprep.subr.bf16.mxu0 0
        %650 = vmatpush1.bf16.msra.mxu0 %v607
        %651 = vmatprep.subr.bf16.mxu0 0
        %652 = vmatpush1.bf16.msra.mxu0 %v608
        %653 = vmatprep.subr.bf16.mxu0 0
        %654 = vmatpush1.bf16.msra.mxu0 %v609
        %655 = vmatprep.subr.bf16.mxu0 0
        %656 = vmatpush1.bf16.msra.mxu0 %v610
        %657 = vmatprep.subr.bf16.mxu0 0
        %658 = vmatpush1.bf16.msra.mxu0 %v611
        %659 = vmatprep.subr.bf16.mxu0 0
        %660 = vmatpush1.bf16.msra.mxu0 %v612
        %661 = vmatprep.mubr.bf16.mxu0 %v493
        %662 = vmatmul.mubr.bf16.gmra.mrb[0].mxu0 %v492
        %v663 = vpop.f32.mrb[0].mxu0
        %v664 = vadd.f32 %v531, %v663
        %v665 = vpop.f32.mrb[0].mxu0
        %v666 = vpop.f32.mrb[0].mxu0
        %v667 = vpop.f32.mrb[0].mxu0
        %668 = vdwg.mxu0
        %v669 = vmax.f32 %v664, 0.0
        %v670 = vpack.c.bf16 %v669, %v669
        %v671 = vld [vmem:[#allocation8] sm:$0xf]
        %v672 = vld [vmem:[#allocation8 + $0x4] sm:$0xf]
        %v673 = vld [vmem:[#allocation8 + $0x8] sm:$0xf]
        %v674 = vld [vmem:[#allocation8 + $0xc] sm:$0xf]
        %v675 = vld [vmem:[#allocation8 + $0x10] sm:$0xf]
        %v676 = vld [vmem:[#allocation8 + $0x14] sm:$0xf]
        %v677 = vld [vmem:[#allocation8 + $0x18] sm:$0xf]
        %v678 = vld [vmem:[#allocation8 + $0x1c] sm:$0xf]
        %v679 = vld [vmem:[#allocation8 + $0x20] sm:$0xf]
        %v680 = vld [vmem:[#allocation8 + $0x24] sm:$0xf]
        %v681 = vld [vmem:[#allocation8 + $0x28] sm:$0xf]
        %v682 = vld [vmem:[#allocation8 + $0x2c] sm:$0xf]
        %v683 = vld [vmem:[#allocation8 + $0x30] sm:$0xf]
        %v684 = vld [vmem:[#allocation8 + $0x34] sm:$0xf]
        %v685 = vld [vmem:[#allocation8 + $0x38] sm:$0xf]
        %v686 = vld [vmem:[#allocation8 + $0x3c] sm:$0xf]
        %v687 = vld [vmem:[%s6] sm:$0x1]
        %v689 = vlaneseq
        %v690 = vshrl.u32 %v689, 7
        %v691 = vsub.s32 0, %v690
        %v692 = vrot.slane %v687, %v691
        %v710 = vunpack.c.l.b16 %v671
        %v711 = vunpack.c.l.b16 %v672
        %v712 = vunpack.c.l.b16 %v673
        %v713 = vunpack.c.l.b16 %v674
        %v714 = vunpack.c.l.b16 %v675
        %v715 = vunpack.c.l.b16 %v676
        %v716 = vunpack.c.l.b16 %v677
        %v717 = vunpack.c.l.b16 %v678
        %v718 = vunpack.c.l.b16 %v679
        %v719 = vunpack.c.l.b16 %v680
        %v720 = vunpack.c.l.b16 %v681
        %v721 = vunpack.c.l.b16 %v682
        %v722 = vunpack.c.l.b16 %v683
        %v723 = vunpack.c.l.b16 %v684
        %v724 = vunpack.c.l.b16 %v685
        %v725 = vunpack.c.l.b16 %v686
        %v726 = vpack.c.b16 %v711, %v710
        %v727 = vpack.c.b16 %v713, %v712
        %v728 = vpack.c.b16 %v715, %v714
        %v729 = vpack.c.b16 %v717, %v716
        %v730 = vpack.c.b16 %v719, %v718
        %v731 = vpack.c.b16 %v721, %v720
        %v732 = vpack.c.b16 %v723, %v722
        %v733 = vpack.c.b16 %v725, %v724
        %742 = vmatprep.subr.bf16.mxu0 0
        %743 = vmatpush1.bf16.msra.mxu0 %v726
        %744 = vmatprep.subr.bf16.mxu0 0
        %745 = vmatpush1.bf16.msra.mxu0 %v727
        %746 = vmatprep.subr.bf16.mxu0 0
        %747 = vmatpush1.bf16.msra.mxu0 %v728
        %748 = vmatprep.subr.bf16.mxu0 0
        %749 = vmatpush1.bf16.msra.mxu0 %v729
        %750 = vmatprep.subr.bf16.mxu0 0
        %751 = vmatpush1.bf16.msra.mxu0 %v730
        %752 = vmatprep.subr.bf16.mxu0 0
        %753 = vmatpush1.bf16.msra.mxu0 %v731
        %754 = vmatprep.subr.bf16.mxu0 0
        %755 = vmatpush1.bf16.msra.mxu0 %v732
        %756 = vmatprep.subr.bf16.mxu0 0
        %757 = vmatpush1.bf16.msra.mxu0 %v733
        %758 = vmatprep.subr.bf16.mxu0 0
        %759 = vmatpush1.bf16.msra.mxu0 0
        %760 = vmatprep.subr.bf16.mxu0 0
        %761 = vmatpush1.bf16.msra.mxu0 0
        %762 = vmatprep.subr.bf16.mxu0 0
        %763 = vmatpush1.bf16.msra.mxu0 0
        %764 = vmatprep.subr.bf16.mxu0 0
        %765 = vmatpush1.bf16.msra.mxu0 0
        %766 = vmatprep.subr.bf16.mxu0 0
        %767 = vmatpush1.bf16.msra.mxu0 0
        %768 = vmatprep.subr.bf16.mxu0 0
        %769 = vmatpush1.bf16.msra.mxu0 0
        %770 = vmatprep.subr.bf16.mxu0 0
        %771 = vmatpush1.bf16.msra.mxu0 0
        %772 = vmatprep.subr.bf16.mxu0 0
        %773 = vmatpush1.bf16.msra.mxu0 0
        %774 = vmatprep.mubr.bf16.mxu0 0
        %775 = vmatmul.mubr.bf16.gmra.mrb[0].mxu0 %v670
        %v776 = vpop.f32.mrb[0].mxu0
        %v777 = vadd.f32 %v692, %v776
        %v778 = vpop.f32.mrb[0].mxu0
        %v779 = vpop.f32.mrb[0].mxu0
        %v780 = vpop.f32.mrb[0].mxu0
        %781 = vdwg.mxu0
        %v782 = vtanh.pop %v777
        %v783 = vpack.c.bf16 %v782, %v782
        %784 = vst [vmem:[%s337] sm:$0xf] %v783
        %s785 = sand.u32 %s186, 1
        %s786 = scalar_lea.sflag [#allocation4], %s785
        %s787 = sand.u32 %s186, 1
        %s788 = smul.addr %s787, 4
        %s789 = scalar_lea.vmem [#allocation10], %s788
        // Predicated region
        $region65: #{mlp_forward.1} parent=47 // pred_check
          %p790 = pneg %p196
        $region66: #{mlp_forward.1} parent=47 // pred_check_branch
          %792 = sbr.rel (%p790) target = $region68
        $region67: #{mlp_forward.1} parent=47 // pred_region
          %s794 = ssub.s32 64, 64
          %795 = vsyncadd %s786, %s794
          %s796 = smul.addr %s26, 64
          %s797 = scalar_lea.hbm %s7, %s796
          %s799 = sshll.u32 %s789, 4
          %s800 = int_to_ptr.vmem [resolvable:$true] %s799
          %802 = dma.vmem_to_hbm [thread:$0]  %s800, 64, %s797, %s786
        $region68: #{mlp_forward.1} parent=47 // pred_fallthru
          _
      $region48: #{mlp_forward.1} parent=5 // pred_fallthru
        _
      %p803 = scmp.le.s32.totalorder 2, %s21
      // Predicated region
      $region69: #{mlp_forward.1} parent=5 // pred_check
        %p804 = pneg %p803
      $region70: #{mlp_forward.1} parent=5 // pred_check_branch
        %806 = sbr.rel (%p804) target = $region72
      $region71: #{mlp_forward.1} parent=5 // pred_region
        %s807 = ssub.s32 %s21, 2
        // Predicated region
        $region73: #{mlp_forward.1} parent=71 // pred_check
          %p808 = pneg %p202
        $region74: #{mlp_forward.1} parent=71 // pred_check_branch
          %810 = sbr.rel (%p808) target = $region76
        $region75: #{mlp_forward.1} parent=71 // pred_region
          %s811 = sand.u32 %s187, 1
          %s812 = scalar_lea.sflag [#allocation4], %s811
          %s813 = sand.u32 %s187, 1
          %s814 = smul.addr %s813, 4
          %s815 = scalar_lea.vmem [#allocation10], %s814
          %816 = dma.done %s812, 64
        $region76: #{mlp_forward.1} parent=71 // pred_fallthru
          _
      $region72: #{mlp_forward.1} parent=5 // pred_fallthru
        _
    $region6: #{mlp_forward.1} parent=1 // loop_footer
      %s25 = sadd.s32 1, %s21
    $region7: #{mlp_forward.1} parent=1 // loop_footer_branch
      %20 = sbr.rel target = $region3
    $region8: #{mlp_forward.1} parent=1 // loop_exit
      _
    %817 = vsyncpa [#allocation3], 1
    %s818 = scalar_lea.sflag [#allocation3], 1
    %819 = vsyncpa %s818, 1
    %820 = vsyncpa [#allocation6], 1
    %821 = vsyncpa [#allocation9], 1
    %822 = vsyncpa [#allocation4], 1
    %s823 = scalar_lea.sflag [#allocation4], 1
    %824 = vsyncpa %s823, 1

</llo_original>
